<compile_context>
chip_gen: v7x
topology: tpu7x:2x2x1
jax: 0.10.0
libtpu: 0.0.40
codegen_flags: <defaults>
</compile_context>

<pallas_src>
import jax
import jax.numpy as jnp
from jax.experimental import pallas as pl
from jax.experimental.pallas import tpu as pltpu

SEQ_IN = 10                    # implied by Linear(80, 50): (seq-2)*10 == 80
C_IN = 19
C_OUT = 10
KSIZE = 3
SEQ_OUT = SEQ_IN - KSIZE + 1   # 8
FLAT = SEQ_OUT * C_OUT         # 80
HID = 50
N_CLASSES = 2
FEAT_IN = SEQ_IN * C_IN        # 190


def _round_up(n, m):
    return ((n + m - 1) // m) * m


# ---------------------------------------------------------------------------
# Kernel: one batch tile -> logits tile.  x: (TB, 190), w: (190, 2), b: (1, 2)
# ---------------------------------------------------------------------------
def ta_cnn_kernel(x_ref, w_ref, b_ref, out_ref):
    out_ref[...] = (
        jnp.dot(x_ref[...], w_ref[...], preferred_element_type=jnp.float32)
        + b_ref[...]
    ).astype(out_ref.dtype)


# ---------------------------------------------------------------------------
# Wrapper-side weight folding (legal because the network is purely affine).
#   feat[b, t*10 + o] = sum_{k,c} w_conv[o, c, k] * x[b, (t+k)*19 + c] + b_conv[o]
#   logits            = (feat @ w1.T + b1) @ w2.T + b2
# ---------------------------------------------------------------------------
def fold_params(params):
    w_conv, b_conv, w1, b1, w2, b2 = params  # torch layouts

    # Conv1d + flatten as a (190, 80) matrix acting on x.reshape(B, 190).
    m = jnp.zeros((FEAT_IN, FLAT), jnp.float32)
    for t in range(SEQ_OUT):
        for k in range(KSIZE):
            m = m.at[
                (t + k) * C_IN:(t + k + 1) * C_IN, t * C_OUT:(t + 1) * C_OUT
            ].add(w_conv[:, :, k].T)
    b_feat = jnp.tile(b_conv, (SEQ_OUT,))            # (80,) ; b_feat[t*10+o] = b_conv[o]

    w_12 = w1.T @ w2.T                               # (80, 2)
    w_total = m @ w_12                               # (190, 2)
    b_total = b_feat @ w_12 + b1 @ w2.T + b2         # (2,)
    return w_total, b_total.reshape(1, N_CLASSES)


def ta_cnn_forward(x, params, *, block_b=4096):
    """x: (B, 10, 19) float32 -> logits (B, 2) float32."""
    w_total, b_total = fold_params(params)

    batch = x.shape[0]
    x2d = x.reshape(batch, FEAT_IN).astype(jnp.float32)  # lane-dense 190-wide

    # Pad rows only to a multiple of 8 (sublane alignment); at most 7 rows.
    padded = _round_up(max(batch, 8), 8)
    if padded != batch:
        x2d = jnp.pad(x2d, ((0, padded - batch), (0, 0)))

    # Batch tile: multiple of 8, capped at block_b.  At block_b=4096 the f32
    # input tile is ~3.1 MiB -> ~6.2 MiB double-buffered, safely under the
    # default scoped-VMEM limit on v5e/v6e/v7x.  A possibly-ragged last block
    # is handled by Pallas edge-block clamping (no wasted full-tile DMA).
    tb = min(_round_up(block_b, 8), padded)
    grid = (pl.cdiv(padded, tb),)

    bytes_accessed = (
        padded * FEAT_IN * 4            # x read
        + padded * N_CLASSES * 4        # logits write
        + FEAT_IN * N_CLASSES * 4       # folded weight
        + N_CLASSES * 4                 # folded bias
    )
    flops = 2 * padded * FEAT_IN * N_CLASSES

    out = pl.pallas_call(
        ta_cnn_kernel,
        out_shape=jax.ShapeDtypeStruct((padded, N_CLASSES), jnp.float32),
        grid_spec=pltpu.PrefetchScalarGridSpec(
            num_scalar_prefetch=0,
            grid=grid,
            in_specs=[
                pl.BlockSpec((tb, FEAT_IN), lambda i: (i, 0)),          # x tile
                pl.BlockSpec((FEAT_IN, N_CLASSES), lambda i: (0, 0)),   # weight (resident)
                pl.BlockSpec((1, N_CLASSES), lambda i: (0, 0)),         # bias (resident)
            ],
            out_specs=pl.BlockSpec((tb, N_CLASSES), lambda i: (i, 0)),
        ),
        compiler_params=pltpu.CompilerParams(
            dimension_semantics=("parallel",),   # shard batch tiles across TCs (v7x)
        ),
        cost_estimate=pl.CostEstimate(
            flops=int(flops), transcendentals=0, bytes_accessed=int(bytes_accessed)
        ),
    )(x2d, w_total, b_total)
    return out[:batch]


# ---------------------------------------------------------------------------
# Deterministic synthetic parameters in PyTorch layouts + default-init bounds.
# ---------------------------------------------------------------------------
def init_params(key):
    k = jax.random.split(key, 6)

    bnd_c = 1.0 / jnp.sqrt(jnp.float32(C_IN * KSIZE))
    w_conv = jax.random.uniform(k[0], (C_OUT, C_IN, KSIZE), jnp.float32, -bnd_c, bnd_c)
    b_conv = jax.random.uniform(k[1], (C_OUT,), jnp.float32, -bnd_c, bnd_c)

    bnd_1 = 1.0 / jnp.sqrt(jnp.float32(FLAT))
    w1 = jax.random.uniform(k[2], (HID, FLAT), jnp.float32, -bnd_1, bnd_1)
    b1 = jax.random.uniform(k[3], (HID,), jnp.float32, -bnd_1, bnd_1)

    bnd_2 = 1.0 / jnp.sqrt(jnp.float32(HID))
    w2 = jax.random.uniform(k[4], (N_CLASSES, HID), jnp.float32, -bnd_2, bnd_2)
    b2 = jax.random.uniform(k[5], (N_CLASSES,), jnp.float32, -bnd_2, bnd_2)

    return w_conv, b_conv, w1, b1, w2, b2


# ---------------------------------------------------------------------------
# Plain-JAX reference mirroring the PyTorch forward step-by-step (un-fused),
# used to validate both the affine folding and the kernel.
# ---------------------------------------------------------------------------
def reference_forward(x, params):
    w_conv, b_conv, w1, b1, w2, b2 = params
    b = x.shape[0]
    rows = []
    for t in range(SEQ_OUT):
        acc = jnp.zeros((b, C_OUT), jnp.float32)
        for k in range(KSIZE):
            acc = acc + x[:, t + k, :] @ w_conv[:, :, k].T
        rows.append(acc + b_conv[None, :])
    feat = jnp.concatenate(rows, axis=1)           # (B, 80), index t*10 + o
    h = feat @ w1.T + b1[None, :]
    return h @ w2.T + b2[None, :]


if __name__ == "__main__":
    key = jax.random.PRNGKey(0)
    k_param, k_x = jax.random.split(key)

    params = init_params(k_param)
    batch = 2
    x = jax.random.normal(k_x, (batch, SEQ_IN, C_IN), jnp.float32)

    logits = ta_cnn_forward(x, params)
    jax.block_until_ready(logits)

    ref = reference_forward(x, params)
    assert logits.shape == (batch, N_CLASSES)
    assert jnp.allclose(logits, ref, atol=1e-4, rtol=1e-4)

    print("KERNEL_OK")
</pallas_src>

<mosaic_0001>
module attributes {stable_mosaic.version = 11 : i64} {
  func.func @ta_cnn_kernel(%arg0: i32, %arg1: memref<8x190xf32, #tpu.memory_space<vmem>>, %arg2: memref<190x2xf32, #tpu.memory_space<vmem>>, %arg3: memref<1x2xf32, #tpu.memory_space<vmem>>, %arg4: memref<8x2xf32, #tpu.memory_space<vmem>>) attributes {dimension_semantics = [#tpu.dimension_semantics<parallel>], iteration_bounds = array<i64: 1>, scalar_prefetch = 0 : i64, scratch_operands = 0 : i64, tpu.core_type = #tpu.core_type<tc>, window_params = [{transform_indices = @transform_0, window_bounds = array<i64: 8, 190>}, {pipeline_mode = #tpu.pipeline_mode<synchronous>, transform_indices = @transform_1, window_bounds = array<i64: 190, 2>}, {pipeline_mode = #tpu.pipeline_mode<synchronous>, transform_indices = @transform_2, window_bounds = array<i64: 1, 2>}, {transform_indices = @transform_3, window_bounds = array<i64: 8, 2>}]} {
    %c0 = arith.constant 0 : index
    %c0_0 = arith.constant 0 : index
    %0 = vector.load %arg1[%c0, %c0_0] : memref<8x190xf32, #tpu.memory_space<vmem>>, vector<8x190xf32>
    %c0_1 = arith.constant 0 : index
    %c0_2 = arith.constant 0 : index
    %1 = vector.load %arg2[%c0_1, %c0_2] : memref<190x2xf32, #tpu.memory_space<vmem>>, vector<190x2xf32>
    %cst = arith.constant dense<0.000000e+00> : vector<8x2xf32>
    %2 = tpu.matmul %0, %1, %cst {dimension_numbers = #tpu.dot_dimension_numbers<[1], [0], [0], [1], [0, 0, 1, 1], [], []>} : vector<8x190xf32>, vector<190x2xf32>, vector<8x2xf32> -> vector<8x2xf32>
    %c0_3 = arith.constant 0 : index
    %c0_4 = arith.constant 0 : index
    %3 = vector.load %arg3[%c0_3, %c0_4] : memref<1x2xf32, #tpu.memory_space<vmem>>, vector<1x2xf32>
    %4 = vector.broadcast %3 : vector<1x2xf32> to vector<8x2xf32>
    %5 = arith.addf %2, %4 : vector<8x2xf32>
    %c0_5 = arith.constant 0 : index
    %c0_6 = arith.constant 0 : index
    %6 = vector.load %arg4[%c0_5, %c0_6] : memref<8x2xf32, #tpu.memory_space<vmem>>, vector<8x2xf32>
    tpu.vector_store %arg4[%c0_5, %c0_6], %5 {strides = array<i32>} : memref<8x2xf32, #tpu.memory_space<vmem>>, vector<8x2xf32>,
    return
  }
  func.func @transform_0(%arg0: i32) -> (i32, i32) {
    %c0_i32 = arith.constant 0 : i32
    %c0_i32_0 = arith.constant 0 : i32
    return %arg0, %c0_i32 : i32, i32
  }
  func.func @transform_1(%arg0: i32) -> (i32, i32) {
    %c0_i32 = arith.constant 0 : i32
    %c0_i32_0 = arith.constant 0 : i32
    %c0_i32_1 = arith.constant 0 : i32
    return %c0_i32, %c0_i32_0 : i32, i32
  }
  func.func @transform_2(%arg0: i32) -> (i32, i32) {
    %c0_i32 = arith.constant 0 : i32
    %c0_i32_0 = arith.constant 0 : i32
    %c0_i32_1 = arith.constant 0 : i32
    return %c0_i32, %c0_i32_0 : i32, i32
  }
  func.func @transform_3(%arg0: i32) -> (i32, i32) {
    %c0_i32 = arith.constant 0 : i32
    %c0_i32_0 = arith.constant 0 : i32
    return %arg0, %c0_i32 : i32, i32
  }
}

</mosaic_0001>

<llo_original>
// kernel: tpu_custom_call.1
$region0: #{tpu_custom_call.1}
  #allocation0 [shape = 'u32[]', space=smem, size = 0x4, offset = 0x4, fixed_abs, tag = 'smem constant byte address 0x4 - core index']
  #allocation1 [shape = 'u32[144,128]{1,0:T(1,128)}', space=vmem, size = 0x12000, scoped, tag = 'internal scratch']
  %s0 = inlined_call_operand.vmem [shape: f32[8,190], index: 0, kind: input, shape index: {}]
  %s1 = inlined_call_operand.vmem [shape: f32[190,2], index: 1, kind: input, shape index: {}]
  %s2 = inlined_call_operand.vmem [shape: f32[1,2], index: 2, kind: input, shape index: {}]
  %s3 = inlined_call_operand.vmem [shape: f32[8,2], index: 3, kind: output, shape index: {}]
  %s4 = sld [smem:[#allocation0]]
  $region22: #{tpu_custom_call.1} parent=0
    _
  %s6 = ssub.s32 1, %s4
  %s7 = scalar_select 0, %s6, %s4
  // Predicated region
  $region2: #{tpu_custom_call.1} parent=0 // pred_check
    _
  $region3: #{tpu_custom_call.1} parent=0 // pred_check_branch
    %9 = sbr.rel (0) target = $region5
  $region4: #{tpu_custom_call.1} parent=0 // pred_region
    _
  $region5: #{tpu_custom_call.1} parent=0 // pred_fallthru
    _
  // Predicated region
  $region6: #{tpu_custom_call.1} parent=0 // pred_check
    _
  $region7: #{tpu_custom_call.1} parent=0 // pred_check_branch
    %11 = sbr.rel (0) target = $region9
  $region8: #{tpu_custom_call.1} parent=0 // pred_region
    _
  $region9: #{tpu_custom_call.1} parent=0 // pred_fallthru
    _
  // Predicated region
  $region10: #{tpu_custom_call.1} parent=0 // pred_check
    _
  $region11: #{tpu_custom_call.1} parent=0 // pred_check_branch
    %13 = sbr.rel (0) target = $region13
  $region12: #{tpu_custom_call.1} parent=0 // pred_region
    _
  $region13: #{tpu_custom_call.1} parent=0 // pred_fallthru
    _
  %v14 = vld [vmem:[%s0] sm:$0xff]
  %v15 = vld [vmem:[%s0 + $0x8] sm:$0xff]
  %v16 = vld [vmem:[%s1] sm:$0xff]
  %v17 = vld [vmem:[%s1 + $0x8] sm:$0xff]
  %v18 = vld [vmem:[%s1 + $0x10] sm:$0xff]
  %v19 = vld [vmem:[%s1 + $0x18] sm:$0xff]
  %v20 = vld [vmem:[%s1 + $0x20] sm:$0xff]
  %v21 = vld [vmem:[%s1 + $0x28] sm:$0xff]
  %v22 = vld [vmem:[%s1 + $0x30] sm:$0xff]
  %v23 = vld [vmem:[%s1 + $0x38] sm:$0xff]
  %v24 = vld [vmem:[%s1 + $0x40] sm:$0xff]
  %v25 = vld [vmem:[%s1 + $0x48] sm:$0xff]
  %v26 = vld [vmem:[%s1 + $0x50] sm:$0xff]
  %v27 = vld [vmem:[%s1 + $0x58] sm:$0xff]
  %v28 = vld [vmem:[%s1 + $0x60] sm:$0xff]
  %v29 = vld [vmem:[%s1 + $0x68] sm:$0xff]
  %v30 = vld [vmem:[%s1 + $0x70] sm:$0xff]
  %v31 = vld [vmem:[%s1 + $0x78] sm:$0xff]
  %v32 = vld [vmem:[%s1 + $0x80] sm:$0xff]
  %v33 = vld [vmem:[%s1 + $0x88] sm:$0xff]
  %v34 = vld [vmem:[%s1 + $0x90] sm:$0xff]
  %v35 = vld [vmem:[%s1 + $0x98] sm:$0xff]
  %v36 = vld [vmem:[%s1 + $0xa0] sm:$0xff]
  %v37 = vld [vmem:[%s1 + $0xa8] sm:$0xff]
  %v38 = vld [vmem:[%s1 + $0xb0] sm:$0xff]
  %v39 = vld [vmem:[%s1 + $0xb8] sm:$0x3f]
  %v40 = vld [vmem:[%s2] sm:$0x1]
  %v42 = vlaneseq
  %v43 = vshrl.u32 %v42, 7
  %v44 = vsub.s32 0, %v43
  %v45 = vrot.slane %v40, %v44
  %vm47 = vcmask 506880
  %v49 = vsel %vm47, %v15, 0
  %vm51 = vcmask 1045504
  %v53 = vsel %vm51, %v39, 0
  %55 = vmatprep.subr.mxu0 0.0
  %56 = vmatpush1.msra.mxu0 %v16
  %57 = vmatprep.subr.mxu0 0.0
  %58 = vmatpush1.msra.mxu0 %v17
  %59 = vmatprep.subr.mxu0 0.0
  %60 = vmatpush1.msra.mxu0 %v18
  %61 = vmatprep.subr.mxu0 0.0
  %62 = vmatpush1.msra.mxu0 %v19
  %63 = vmatprep.subr.mxu0 0.0
  %64 = vmatpush1.msra.mxu0 %v20
  %65 = vmatprep.subr.mxu0 0.0
  %66 = vmatpush1.msra.mxu0 %v21
  %67 = vmatprep.subr.mxu0 0.0
  %68 = vmatpush1.msra.mxu0 %v22
  %69 = vmatprep.subr.mxu0 0.0
  %70 = vmatpush1.msra.mxu0 %v23
  %71 = vmatprep.subr.mxu0 0.0
  %72 = vmatpush1.msra.mxu0 %v24
  %73 = vmatprep.subr.mxu0 0.0
  %74 = vmatpush1.msra.mxu0 %v25
  %75 = vmatprep.subr.mxu0 0.0
  %76 = vmatpush1.msra.mxu0 %v26
  %77 = vmatprep.subr.mxu0 0.0
  %78 = vmatpush1.msra.mxu0 %v27
  %79 = vmatprep.subr.mxu0 0.0
  %80 = vmatpush1.msra.mxu0 %v28
  %81 = vmatprep.subr.mxu0 0.0
  %82 = vmatpush1.msra.mxu0 %v29
  %83 = vmatprep.subr.mxu0 0.0
  %84 = vmatpush1.msra.mxu0 %v30
  %85 = vmatprep.subr.mxu0 0.0
  %86 = vmatpush1.msra.mxu0 %v31
  %87 = vmatprep.subr.mxu0 0.0
  %88 = vmatpush1.msra.mxu0 %v32
  %89 = vmatprep.subr.mxu0 0.0
  %90 = vmatpush1.msra.mxu0 %v33
  %91 = vmatprep.subr.mxu0 0.0
  %92 = vmatpush1.msra.mxu0 %v34
  %93 = vmatprep.subr.mxu0 0.0
  %94 = vmatpush1.msra.mxu0 %v35
  %95 = vmatprep.subr.mxu0 0.0
  %96 = vmatpush1.msra.mxu0 %v36
  %97 = vmatprep.subr.mxu0 0.0
  %98 = vmatpush1.msra.mxu0 %v37
  %99 = vmatprep.subr.mxu0 0.0
  %100 = vmatpush1.msra.mxu0 %v38
  %101 = vmatprep.subr.mxu0 0.0
  %102 = vmatpush1.msra.mxu0 %v53
  %103 = vmatprep.subr.mxu0 0.0
  %104 = vmatpush1.msra.mxu0 0.0
  %105 = vmatprep.subr.mxu0 0.0
  %106 = vmatpush1.msra.mxu0 0.0
  %107 = vmatprep.subr.mxu0 0.0
  %108 = vmatpush1.msra.mxu0 0.0
  %109 = vmatprep.subr.mxu0 0.0
  %110 = vmatpush1.msra.mxu0 0.0
  %111 = vmatprep.subr.mxu0 0.0
  %112 = vmatpush1.msra.mxu0 0.0
  %113 = vmatprep.subr.mxu0 0.0
  %114 = vmatpush1.msra.mxu0 0.0
  %115 = vmatprep.subr.mxu0 0.0
  %116 = vmatpush1.msra.mxu0 0.0
  %117 = vmatprep.subr.mxu0 0.0
  %118 = vmatpush1.msra.mxu0 0.0
  %119 = vmatprep.mubr.f32.mxu0 %v49
  %120 = vmatmul.mubr.f32.gmra.mrb[0].mxu0 %v14
  %v121 = vpop.f32.mrb[0].mxu0
  %v122 = vadd.f32 %v45, %v121
  %v123 = vpop.f32.mrb[0].mxu0
  %124 = vdwg.mxu0
  %vm125 = vcmask 15360
  %126 = vst.msk [vmem:[%s3] sm:$0xff] %vm125, %v122
  // Predicated region
  $region14: #{tpu_custom_call.1} parent=0 // pred_check
    _
  $region15: #{tpu_custom_call.1} parent=0 // pred_check_branch
    %128 = sbr.rel (0) target = $region17
  $region16: #{tpu_custom_call.1} parent=0 // pred_region
    _
  $region17: #{tpu_custom_call.1} parent=0 // pred_fallthru
    _
  // Predicated region
  $region18: #{tpu_custom_call.1} parent=0 // pred_check
    _
  $region19: #{tpu_custom_call.1} parent=0 // pred_check_branch
    %130 = sbr.rel (0) target = $region21
  $region20: #{tpu_custom_call.1} parent=0 // pred_region
    _
  $region21: #{tpu_custom_call.1} parent=0 // pred_fallthru
    _

</llo_original>
